<compile_context>
chip_gen: v7x
topology: tpu7x:2x2x1
jax: 0.10.0
libtpu: 0.0.40
codegen_flags: <defaults>
</compile_context>

<pallas_src>
import jax
import jax.numpy as jnp
from jax.experimental import pallas as pl
from jax.experimental.pallas import tpu as pltpu


def attn_kernel(x_ref, w1_ref, b1_ref, w2_ref, ctx_ref):
    # x_ref  : (BB, T, D)  block of batch items (input dtype)
    # w1_ref : (D, H)      first linear weight
    # b1_ref : (1, H)      first linear bias (f32)
    # w2_ref : (H, 1)      second linear weight as a column (f32)
    # ctx_ref: (BB, D)     per-batch context vectors
    bb, t, d = x_ref.shape

    x = x_ref[...]                          # keep input dtype for the MXU matmul
    x2 = x.reshape(bb * t, d)               # layout no-op when T % 8 == 0

    # Linear1 + ReLU: (BB*T, D) @ (D, H) on the MXU, f32 accumulation.
    h = jnp.dot(x2, w1_ref[...], preferred_element_type=jnp.float32)
    h = jnp.maximum(h + b1_ref[...], 0.0)   # (BB*T, H) f32

    # Linear2 (H -> 1) also on the MXU (frees VALU work on v6e/v7x).
    # b2 is omitted: softmax over the sequence is shift-invariant, so a scalar
    # score bias is a mathematical no-op for the returned context.
    s = jnp.dot(h, w2_ref[...], preferred_element_type=jnp.float32)  # (BB*T, 1)
    s = s.reshape(bb, t, 1)

    # Numerically-stable softmax over the sequence axis (axis 1).
    m = jnp.max(s, axis=1, keepdims=True)          # (BB, 1, 1)
    e = jnp.exp(s - m)                             # (BB, T, 1)
    denom = jnp.sum(e, axis=1, keepdims=True)      # (BB, 1, 1)
    w = e / denom                                  # exact divide; tiny tensor

    # Weighted sum over T -> (BB, D).  f32 weights are broadcast-multiplied
    # into x (no explicit f32 copy of x); accumulation happens in f32.
    ctx = jnp.sum(w * x, axis=1)                   # (BB, D) f32
    ctx_ref[...] = ctx.astype(ctx_ref.dtype)


def _round_up(v, m):
    return ((v + m - 1) // m) * m


def _vmem_limit_bytes():
    """Per-generation scoped-VMEM limit with headroom below physical capacity
    (128 MiB on v5e/v6e, 64 MiB per TensorCore on v7x)."""
    cap = 64 * 1024 * 1024                         # conservative fallback (v7x-sized)
    try:
        info = pltpu.get_tpu_info()
        cap = int(getattr(info, "vmem_capacity_bytes", cap))
    except Exception:
        pass
    # ~75% of physical, never above 100 MiB (leave room for Mosaic scratch).
    return min(cap * 3 // 4, 100 * 1024 * 1024)


def _block_vmem_bytes(bb, T, D, H, x_itemsize):
    """Approximate per-grid-step VMEM working set, including (8,128) layout
    padding (D < 128 costs full 128 lanes) and double-buffered blocks."""
    tp = _round_up(T, 8)
    dp = _round_up(D, 128)
    hp = _round_up(H, 128)
    x_blk = bb * tp * dp * x_itemsize              # input block (padded layout), x2
    h_act = _round_up(bb * T, 8) * hp * 4          # f32 hidden activation
    wx_f32 = bb * tp * dp * 4                      # f32 weighted product before reduce
    small = 6 * bb * tp * 128 * 4                  # scores / exp / softmax temps (padded)
    out_blk = _round_up(bb, 8) * dp * x_itemsize
    weights = (dp * hp + hp + hp) * 4              # w1, b1, w2
    return 2 * x_blk + h_act + wx_f32 + small + 2 * out_blk + 2 * weights


def _pick_block_b(B, T, D, H, itemsize, budget):
    if B <= 8:
        # Single step; block dims equal the full array dims so the (8,128)
        # BlockSpec constraint is satisfied without padding.
        return B
    bb_cap = _round_up(B, 8)
    if B >= 16:
        # Keep >= 2 grid steps so dimension_semantics=("parallel",) can shard
        # the batch axis across v7x's 2 TensorCores.
        bb_cap = min(bb_cap, _round_up(pl.cdiv(B, 2), 8))
    bb = 8
    cand = 8
    while cand <= bb_cap:
        if _block_vmem_bytes(cand, T, D, H, itemsize) <= budget:
            bb = cand
            cand += 8
        else:
            break
    return bb


def attention_forward(x, w1, b1, w2, b2=None, *, block_b=None, vmem_limit_bytes=None):
    """Pallas forward pass matching the PyTorch Attention module.

    x : (B, T, D);  w1: (D, H);  b1: (H,) or (1, H);  w2: (H, 1) or (H,).
    b2 is accepted but unused (softmax shift-invariance makes a scalar score
    bias a no-op for the returned context).
    """
    del b2  # mathematically irrelevant to the output (softmax shift-invariance)
    B, T, D = x.shape
    H = w1.shape[1]

    w1 = w1.astype(x.dtype)                        # MXU matmul in input dtype
    b1_row = jnp.reshape(b1, (1, H)).astype(jnp.float32)
    w2_col = jnp.reshape(w2, (H, 1)).astype(jnp.float32)

    if vmem_limit_bytes is None:
        vmem_limit_bytes = _vmem_limit_bytes()
    budget = int(vmem_limit_bytes * 0.8)

    if block_b is None:
        block_b = _pick_block_b(B, T, D, H, x.dtype.itemsize, budget)

    # Pad the batch wrapper-side so every block is full (no masked partial
    # blocks, no fallback to one giant block).
    Bp = _round_up(B, block_b)
    x_in = x if Bp == B else jnp.pad(x, ((0, Bp - B), (0, 0), (0, 0)))
    grid = (Bp // block_b,)

    out = pl.pallas_call(
        attn_kernel,
        out_shape=jax.ShapeDtypeStruct((Bp, D), x.dtype),
        grid_spec=pltpu.PrefetchScalarGridSpec(
            num_scalar_prefetch=0,
            grid=grid,
            in_specs=[
                pl.BlockSpec((block_b, T, D), lambda i: (i, 0, 0)),
                pl.BlockSpec((D, H), lambda i: (0, 0)),
                pl.BlockSpec((1, H), lambda i: (0, 0)),
                pl.BlockSpec((H, 1), lambda i: (0, 0)),
            ],
            out_specs=pl.BlockSpec((block_b, D), lambda i: (i, 0)),
        ),
        compiler_params=pltpu.CompilerParams(
            dimension_semantics=("parallel",),
            vmem_limit_bytes=int(vmem_limit_bytes),
        ),
    )(x_in, w1, b1_row, w2_col)

    return out if Bp == B else out[:B]


def attention_ref(x, w1, b1, w2, b2):
    hi = jax.lax.Precision.HIGHEST
    h = jnp.maximum(
        jnp.einsum("btd,dh->bth", x, w1, precision=hi) + jnp.reshape(b1, (1, 1, -1)),
        0.0,
    )
    s = jnp.einsum("bth,ho->bto", h, jnp.reshape(w2, (-1, 1)), precision=hi)
    s = s + jnp.reshape(b2, (1, 1, 1))
    w = jax.nn.softmax(s, axis=1)
    return jnp.sum(w * x, axis=1)                  # (B, D)


if __name__ == "__main__":
    B, T, D, H = 2, 8, 32, 128

    key = jax.random.PRNGKey(0)
    kx, k1, kb1, k2, kb2 = jax.random.split(key, 5)

    # Deterministic "Linear"-style init (uniform in +/- 1/sqrt(fan_in)).
    x = jax.random.normal(kx, (B, T, D), dtype=jnp.float32)
    w1 = jax.random.uniform(k1, (D, H), jnp.float32, -1.0, 1.0) / jnp.sqrt(D)
    b1 = jax.random.uniform(kb1, (1, H), jnp.float32, -1.0, 1.0) / jnp.sqrt(D)
    w2 = jax.random.uniform(k2, (H, 1), jnp.float32, -1.0, 1.0) / jnp.sqrt(H)
    b2 = jax.random.uniform(kb2, (1, 1), jnp.float32, -1.0, 1.0) / jnp.sqrt(H)

    out = attention_forward(x, w1, b1, w2, b2)
    out = jax.block_until_ready(out)

    ref = attention_ref(x, w1, b1, w2, b2)
    assert out.shape == (B, D)
    assert jnp.allclose(out, ref, atol=1e-4, rtol=1e-4), "mismatch vs JAX reference"

    print("KERNEL_OK")
</pallas_src>

<mosaic_0001>
module attributes {stable_mosaic.version = 11 : i64} {
  func.func @attn_kernel(%arg0: i32, %arg1: memref<2x8x32xf32, #tpu.memory_space<vmem>>, %arg2: memref<32x128xf32, #tpu.memory_space<vmem>>, %arg3: memref<1x128xf32, #tpu.memory_space<vmem>>, %arg4: memref<128x1xf32, #tpu.memory_space<vmem>>, %arg5: memref<2x32xf32, #tpu.memory_space<vmem>>) attributes {dimension_semantics = [#tpu.dimension_semantics<parallel>], iteration_bounds = array<i64: 1>, scalar_prefetch = 0 : i64, scratch_operands = 0 : i64, tpu.core_type = #tpu.core_type<tc>, window_params = [{transform_indices = @transform_0, window_bounds = array<i64: 2, 8, 32>}, {pipeline_mode = #tpu.pipeline_mode<synchronous>, transform_indices = @transform_1, window_bounds = array<i64: 32, 128>}, {pipeline_mode = #tpu.pipeline_mode<synchronous>, transform_indices = @transform_2, window_bounds = array<i64: 1, 128>}, {pipeline_mode = #tpu.pipeline_mode<synchronous>, transform_indices = @transform_3, window_bounds = array<i64: 128, 1>}, {transform_indices = @transform_4, window_bounds = array<i64: 2, 32>}]} {
    %c0 = arith.constant 0 : index
    %c0_0 = arith.constant 0 : index
    %c0_1 = arith.constant 0 : index
    %0 = vector.load %arg1[%c0, %c0_0, %c0_1] : memref<2x8x32xf32, #tpu.memory_space<vmem>>, vector<2x8x32xf32>
    %1 = vector.shape_cast %0 : vector<2x8x32xf32> to vector<16x32xf32>
    %c0_2 = arith.constant 0 : index
    %c0_3 = arith.constant 0 : index
    %2 = vector.load %arg2[%c0_2, %c0_3] : memref<32x128xf32, #tpu.memory_space<vmem>>, vector<32x128xf32>
    %cst = arith.constant dense<0.000000e+00> : vector<16x128xf32>
    %3 = tpu.matmul %1, %2, %cst {dimension_numbers = #tpu.dot_dimension_numbers<[1], [0], [0], [1], [0, 0, 1, 1], [], []>} : vector<16x32xf32>, vector<32x128xf32>, vector<16x128xf32> -> vector<16x128xf32>
    %c0_4 = arith.constant 0 : index
    %c0_5 = arith.constant 0 : index
    %4 = vector.load %arg3[%c0_4, %c0_5] : memref<1x128xf32, #tpu.memory_space<vmem>>, vector<1x128xf32>
    %5 = vector.broadcast %4 : vector<1x128xf32> to vector<16x128xf32>
    %6 = arith.addf %3, %5 : vector<16x128xf32>
    %cst_6 = arith.constant 0.000000e+00 : f32
    %7 = vector.broadcast %cst_6 : f32 to vector<16x128xf32>
    %8 = arith.maximumf %6, %7 : vector<16x128xf32>
    %c0_7 = arith.constant 0 : index
    %c0_8 = arith.constant 0 : index
    %9 = vector.load %arg4[%c0_7, %c0_8] : memref<128x1xf32, #tpu.memory_space<vmem>>, vector<128x1xf32>
    %cst_9 = arith.constant dense<0.000000e+00> : vector<16x1xf32>
    %10 = tpu.matmul %8, %9, %cst_9 {dimension_numbers = #tpu.dot_dimension_numbers<[1], [0], [0], [1], [0, 0, 1, 1], [], []>} : vector<16x128xf32>, vector<128x1xf32>, vector<16x1xf32> -> vector<16x1xf32>
    %11 = vector.shape_cast %10 : vector<16x1xf32> to vector<2x8x1xf32>
    %cst_10 = arith.constant dense<0xFF800000> : vector<2x1xf32>
    %12 = vector.multi_reduction <maximumf>, %11, %cst_10 [1] : vector<2x8x1xf32> to vector<2x1xf32>
    %13 = vector.shape_cast %12 : vector<2x1xf32> to vector<2x1x1xf32>
    %14 = vector.broadcast %13 : vector<2x1x1xf32> to vector<2x8x1xf32>
    %15 = arith.subf %11, %14 : vector<2x8x1xf32>
    %16 = math.exp %15 : vector<2x8x1xf32>
    %cst_11 = arith.constant dense<0.000000e+00> : vector<2x1xf32>
    %17 = vector.multi_reduction <add>, %16, %cst_11 [1] : vector<2x8x1xf32> to vector<2x1xf32>
    %18 = vector.shape_cast %17 : vector<2x1xf32> to vector<2x1x1xf32>
    %19 = vector.broadcast %18 : vector<2x1x1xf32> to vector<2x8x1xf32>
    %20 = arith.divf %16, %19 : vector<2x8x1xf32>
    %21 = vector.broadcast %20 : vector<2x8x1xf32> to vector<2x8x32xf32>
    %22 = arith.mulf %21, %0 : vector<2x8x32xf32>
    %cst_12 = arith.constant dense<0.000000e+00> : vector<2x32xf32>
    %23 = vector.multi_reduction <add>, %22, %cst_12 [1] : vector<2x8x32xf32> to vector<2x32xf32>
    %c0_13 = arith.constant 0 : index
    %c0_14 = arith.constant 0 : index
    %24 = vector.load %arg5[%c0_13, %c0_14] : memref<2x32xf32, #tpu.memory_space<vmem>>, vector<2x32xf32>
    tpu.vector_store %arg5[%c0_13, %c0_14], %23 {strides = array<i32>} : memref<2x32xf32, #tpu.memory_space<vmem>>, vector<2x32xf32>,
    return
  }
  func.func @transform_0(%arg0: i32) -> (i32, i32, i32) {
    %c0_i32 = arith.constant 0 : i32
    %c0_i32_0 = arith.constant 0 : i32
    %c0_i32_1 = arith.constant 0 : i32
    return %arg0, %c0_i32, %c0_i32_0 : i32, i32, i32
  }
  func.func @transform_1(%arg0: i32) -> (i32, i32) {
    %c0_i32 = arith.constant 0 : i32
    %c0_i32_0 = arith.constant 0 : i32
    %c0_i32_1 = arith.constant 0 : i32
    return %c0_i32, %c0_i32_0 : i32, i32
  }
  func.func @transform_2(%arg0: i32) -> (i32, i32) {
    %c0_i32 = arith.constant 0 : i32
    %c0_i32_0 = arith.constant 0 : i32
    %c0_i32_1 = arith.constant 0 : i32
    return %c0_i32, %c0_i32_0 : i32, i32
  }
  func.func @transform_3(%arg0: i32) -> (i32, i32) {
    %c0_i32 = arith.constant 0 : i32
    %c0_i32_0 = arith.constant 0 : i32
    %c0_i32_1 = arith.constant 0 : i32
    return %c0_i32, %c0_i32_0 : i32, i32
  }
  func.func @transform_4(%arg0: i32) -> (i32, i32) {
    %c0_i32 = arith.constant 0 : i32
    %c0_i32_0 = arith.constant 0 : i32
    return %arg0, %c0_i32 : i32, i32
  }
}

</mosaic_0001>

<llo_original>
// kernel: tpu_custom_call.1
$region0: #{tpu_custom_call.1}
  #allocation0 [shape = 'u32[]', space=smem, size = 0x4, offset = 0x4, fixed_abs, tag = 'smem constant byte address 0x4 - core index']
  #allocation1 [shape = 'u32[144,128]{1,0:T(1,128)}', space=vmem, size = 0x12000, scoped, tag = 'internal scratch']
  %s0 = inlined_call_operand.vmem [shape: f32[2,8,32], index: 0, kind: input, shape index: {}]
  %s1 = inlined_call_operand.vmem [shape: f32[32,128], index: 1, kind: input, shape index: {}]
  %s2 = inlined_call_operand.vmem [shape: f32[1,128], index: 2, kind: input, shape index: {}]
  %s3 = inlined_call_operand.vmem [shape: f32[128,1], index: 3, kind: input, shape index: {}]
  %s4 = inlined_call_operand.hbm [shape: f32[2,32], index: 4, kind: output, shape index: {}]
  %s5 = sld [smem:[#allocation0]]
  $region26: #{tpu_custom_call.1} parent=0
    _
  %s7 = ssub.s32 1, %s5
  %s8 = scalar_select 0, %s7, %s5
  $region1: #{tpu_custom_call.1} parent=0
    #allocation2 [shape = 'u8[1024]{0}', space=vmem, size = 0x400, scoped, tag = 'output window, operand 0, single buffered']
    #allocation3 [shape = 's32[1]{0}', space=sflag, size = 0x4, scoped, tag = 'scoped memory for tpu_custom_call.1']
    %9 = vsyncpa [#allocation3], 0
    // Predicated region
    $region2: #{tpu_custom_call.1} parent=1 // pred_check
      _
    $region3: #{tpu_custom_call.1} parent=1 // pred_check_branch
      %11 = sbr.rel (0) target = $region5
    $region4: #{tpu_custom_call.1} parent=1 // pred_region
      _
    $region5: #{tpu_custom_call.1} parent=1 // pred_fallthru
      _
    // Predicated region
    $region6: #{tpu_custom_call.1} parent=1 // pred_check
      _
    $region7: #{tpu_custom_call.1} parent=1 // pred_check_branch
      %13 = sbr.rel (0) target = $region9
    $region8: #{tpu_custom_call.1} parent=1 // pred_region
      _
    $region9: #{tpu_custom_call.1} parent=1 // pred_fallthru
      _
    // Predicated region
    $region10: #{tpu_custom_call.1} parent=1 // pred_check
      _
    $region11: #{tpu_custom_call.1} parent=1 // pred_check_branch
      %15 = sbr.rel (0) target = $region13
    $region12: #{tpu_custom_call.1} parent=1 // pred_region
      _
    $region13: #{tpu_custom_call.1} parent=1 // pred_fallthru
      _
    // Predicated region
    $region14: #{tpu_custom_call.1} parent=1 // pred_check
      _
    $region15: #{tpu_custom_call.1} parent=1 // pred_check_branch
      %17 = sbr.rel (0) target = $region17
    $region16: #{tpu_custom_call.1} parent=1 // pred_region
      _
    $region17: #{tpu_custom_call.1} parent=1 // pred_fallthru
      _
    %v18 = vld [vmem:[%s0] sm:$0xff]
    %v19 = vld [vmem:[%s0 + $0x8] sm:$0xff]
    %v20 = vld [vmem:[%s1] sm:$0xff]
    %v21 = vld [vmem:[%s1 + $0x8] sm:$0xff]
    %v22 = vld [vmem:[%s1 + $0x10] sm:$0xff]
    %v23 = vld [vmem:[%s1 + $0x18] sm:$0xff]
    %v24 = vld [vmem:[%s2] sm:$0x1]
    %v26 = vlaneseq
    %v27 = vshrl.u32 %v26, 7
    %v28 = vsub.s32 0, %v27
    %v29 = vrot.slane %v24, %v28
    %vm31 = vcmask 261120
    %v33 = vsel %vm31, %v18, 0
    %v36 = vsel %vm31, %v19, 0
    %38 = vmatprep.subr.mxu0 0.0
    %39 = vmatpush1.msra.mxu0 %v20
    %40 = vmatprep.subr.mxu0 0.0
    %41 = vmatpush1.msra.mxu0 %v21
    %42 = vmatprep.subr.mxu0 0.0
    %43 = vmatpush1.msra.mxu0 %v22
    %44 = vmatprep.subr.mxu0 0.0
    %45 = vmatpush1.msra.mxu0 %v23
    %46 = vmatprep.subr.mxu0 0.0
    %47 = vmatpush1.msra.mxu0 0.0
    %48 = vmatprep.subr.mxu0 0.0
    %49 = vmatpush1.msra.mxu0 0.0
    %50 = vmatprep.subr.mxu0 0.0
    %51 = vmatpush1.msra.mxu0 0.0
    %52 = vmatprep.subr.mxu0 0.0
    %53 = vmatpush1.msra.mxu0 0.0
    %54 = vmatprep.subr.mxu0 0.0
    %55 = vmatpush1.msra.mxu0 0.0
    %56 = vmatprep.subr.mxu0 0.0
    %57 = vmatpush1.msra.mxu0 0.0
    %58 = vmatprep.subr.mxu0 0.0
    %59 = vmatpush1.msra.mxu0 0.0
    %60 = vmatprep.subr.mxu0 0.0
    %61 = vmatpush1.msra.mxu0 0.0
    %62 = vmatprep.subr.mxu0 0.0
    %63 = vmatpush1.msra.mxu0 0.0
    %64 = vmatprep.subr.mxu0 0.0
    %65 = vmatpush1.msra.mxu0 0.0
    %66 = vmatprep.subr.mxu0 0.0
    %67 = vmatpush1.msra.mxu0 0.0
    %68 = vmatprep.subr.mxu0 0.0
    %69 = vmatpush1.msra.mxu0 0.0
    %70 = vmatprep.subr.mxu0 0.0
    %71 = vmatpush1.msra.mxu0 0.0
    %72 = vmatprep.subr.mxu0 0.0
    %73 = vmatpush1.msra.mxu0 0.0
    %74 = vmatprep.subr.mxu0 0.0
    %75 = vmatpush1.msra.mxu0 0.0
    %76 = vmatprep.subr.mxu0 0.0
    %77 = vmatpush1.msra.mxu0 0.0
    %78 = vmatprep.subr.mxu0 0.0
    %79 = vmatpush1.msra.mxu0 0.0
    %80 = vmatprep.subr.mxu0 0.0
    %81 = vmatpush1.msra.mxu0 0.0
    %82 = vmatprep.subr.mxu0 0.0
    %83 = vmatpush1.msra.mxu0 0.0
    %84 = vmatprep.subr.mxu0 0.0
    %85 = vmatpush1.msra.mxu0 0.0
    %86 = vmatprep.subr.mxu0 0.0
    %87 = vmatpush1.msra.mxu0 0.0
    %88 = vmatprep.subr.mxu0 0.0
    %89 = vmatpush1.msra.mxu0 0.0
    %90 = vmatprep.subr.mxu0 0.0
    %91 = vmatpush1.msra.mxu0 0.0
    %92 = vmatprep.subr.mxu0 0.0
    %93 = vmatpush1.msra.mxu0 0.0
    %94 = vmatprep.subr.mxu0 0.0
    %95 = vmatpush1.msra.mxu0 0.0
    %96 = vmatprep.subr.mxu0 0.0
    %97 = vmatpush1.msra.mxu0 0.0
    %98 = vmatprep.subr.mxu0 0.0
    %99 = vmatpush1.msra.mxu0 0.0
    %100 = vmatprep.subr.mxu0 0.0
    %101 = vmatpush1.msra.mxu0 0.0
    %102 = vmatprep.mubr.f32.mxu0 0.0
    %103 = vmatmul.mubr.f32.gmra.mrb[0].mxu0 %v33
    %v104 = vpop.f32.mrb[0].mxu0
    %v105 = vadd.f32 %v29, %v104
    %v106 = vpop.f32.mrb[0].mxu0
    %107 = vmatprep.mubr.f32.mxu0 0.0
    %108 = vmatmul.mubr.f32.gmra.mrb[0].mxu0 %v36
    %v109 = vpop.f32.mrb[0].mxu0
    %v110 = vadd.f32 %v29, %v109
    %v111 = vpop.f32.mrb[0].mxu0
    %112 = vdwg.mxu0
    %v113 = vmax.f32 %v105, 0.0
    %v114 = vmax.f32 %v110, 0.0
    %v115 = vld [vmem:[%s3] sm:$0xff]
    %v116 = vld [vmem:[%s3 + $0x8] sm:$0xff]
    %v117 = vld [vmem:[%s3 + $0x10] sm:$0xff]
    %v118 = vld [vmem:[%s3 + $0x18] sm:$0xff]
    %v119 = vld [vmem:[%s3 + $0x20] sm:$0xff]
    %v120 = vld [vmem:[%s3 + $0x28] sm:$0xff]
    %v121 = vld [vmem:[%s3 + $0x30] sm:$0xff]
    %v122 = vld [vmem:[%s3 + $0x38] sm:$0xff]
    %v123 = vld [vmem:[%s3 + $0x40] sm:$0xff]
    %v124 = vld [vmem:[%s3 + $0x48] sm:$0xff]
    %v125 = vld [vmem:[%s3 + $0x50] sm:$0xff]
    %v126 = vld [vmem:[%s3 + $0x58] sm:$0xff]
    %v127 = vld [vmem:[%s3 + $0x60] sm:$0xff]
    %v128 = vld [vmem:[%s3 + $0x68] sm:$0xff]
    %v129 = vld [vmem:[%s3 + $0x70] sm:$0xff]
    %v130 = vld [vmem:[%s3 + $0x78] sm:$0xff]
    %131 = vmatprep.subr.mxu0 0.0
    %132 = vmatpush1.msra.mxu0 %v115
    %133 = vmatprep.subr.mxu0 0.0
    %134 = vmatpush1.msra.mxu0 %v116
    %135 = vmatprep.subr.mxu0 0.0
    %136 = vmatpush1.msra.mxu0 %v117
    %137 = vmatprep.subr.mxu0 0.0
    %138 = vmatpush1.msra.mxu0 %v118
    %139 = vmatprep.subr.mxu0 0.0
    %140 = vmatpush1.msra.mxu0 %v119
    %141 = vmatprep.subr.mxu0 0.0
    %142 = vmatpush1.msra.mxu0 %v120
    %143 = vmatprep.subr.mxu0 0.0
    %144 = vmatpush1.msra.mxu0 %v121
    %145 = vmatprep.subr.mxu0 0.0
    %146 = vmatpush1.msra.mxu0 %v122
    %147 = vmatprep.subr.mxu0 0.0
    %148 = vmatpush1.msra.mxu0 %v123
    %149 = vmatprep.subr.mxu0 0.0
    %150 = vmatpush1.msra.mxu0 %v124
    %151 = vmatprep.subr.mxu0 0.0
    %152 = vmatpush1.msra.mxu0 %v125
    %153 = vmatprep.subr.mxu0 0.0
    %154 = vmatpush1.msra.mxu0 %v126
    %155 = vmatprep.subr.mxu0 0.0
    %156 = vmatpush1.msra.mxu0 %v127
    %157 = vmatprep.subr.mxu0 0.0
    %158 = vmatpush1.msra.mxu0 %v128
    %159 = vmatprep.subr.mxu0 0.0
    %160 = vmatpush1.msra.mxu0 %v129
    %161 = vmatprep.subr.mxu0 0.0
    %162 = vmatpush1.msra.mxu0 %v130
    %163 = vmatprep.subr.mxu0 0.0
    %164 = vmatpush1.msra.mxu0 0.0
    %165 = vmatprep.subr.mxu0 0.0
    %166 = vmatpush1.msra.mxu0 0.0
    %167 = vmatprep.subr.mxu0 0.0
    %168 = vmatpush1.msra.mxu0 0.0
    %169 = vmatprep.subr.mxu0 0.0
    %170 = vmatpush1.msra.mxu0 0.0
    %171 = vmatprep.subr.mxu0 0.0
    %172 = vmatpush1.msra.mxu0 0.0
    %173 = vmatprep.subr.mxu0 0.0
    %174 = vmatpush1.msra.mxu0 0.0
    %175 = vmatprep.subr.mxu0 0.0
    %176 = vmatpush1.msra.mxu0 0.0
    %177 = vmatprep.subr.mxu0 0.0
    %178 = vmatpush1.msra.mxu0 0.0
    %179 = vmatprep.subr.mxu0 0.0
    %180 = vmatpush1.msra.mxu0 0.0
    %181 = vmatprep.subr.mxu0 0.0
    %182 = vmatpush1.msra.mxu0 0.0
    %183 = vmatprep.subr.mxu0 0.0
    %184 = vmatpush1.msra.mxu0 0.0
    %185 = vmatprep.subr.mxu0 0.0
    %186 = vmatpush1.msra.mxu0 0.0
    %187 = vmatprep.subr.mxu0 0.0
    %188 = vmatpush1.msra.mxu0 0.0
    %189 = vmatprep.subr.mxu0 0.0
    %190 = vmatpush1.msra.mxu0 0.0
    %191 = vmatprep.subr.mxu0 0.0
    %192 = vmatpush1.msra.mxu0 0.0
    %193 = vmatprep.subr.mxu0 0.0
    %194 = vmatpush1.msra.mxu0 0.0
    %195 = vmatprep.mubr.f32.mxu0 0.0
    %196 = vmatmul.mubr.f32.gmra.mrb[0].mxu0 %v113
    %v197 = vpop.f32.mrb[0].mxu0
    %v198 = vadd.f32 0.0, %v197
    %v199 = vpop.f32.mrb[0].mxu0
    %200 = vmatprep.mubr.f32.mxu0 0.0
    %201 = vmatmul.mubr.f32.gmra.mrb[0].mxu0 %v114
    %v202 = vpop.f32.mrb[0].mxu0
    %v203 = vadd.f32 0.0, %v202
    %v204 = vpop.f32.mrb[0].mxu0
    %205 = vdwg.mxu0
    %vm206 = vcmask 7168
    %v207 = vsel %vm206, %v198, -inf
    %v208 = vrot.slane %v207, 4
    %v209 = vmax.f32 %v207, %v208
    %v210 = vrot.slane %v209, 2
    %v211 = vmax.f32 %v209, %v210
    %v212 = vrot.slane %v211, 1
    %v213 = vmax.f32 %v211, %v212
    %v214 = vsel %vm206, %v203, -inf
    %v215 = vrot.slane %v214, 4
    %v216 = vmax.f32 %v214, %v215
    %v217 = vrot.slane %v216, 2
    %v218 = vmax.f32 %v216, %v217
    %v219 = vrot.slane %v218, 1
    %v220 = vmax.f32 %v218, %v219
    %v221 = vsub.f32 %v198, %v213
    %v222 = vsub.f32 %v203, %v220
    %v223 = vmul.f32 %v221, 1.442695
    %v224 = vpow.pop %v223
    %v225 = vmul.f32 %v222, 1.442695
    %v226 = vpow.pop %v225
    %v227 = vsel %vm206, %v224, 0.0
    %v228 = vrot.slane %v227, 4
    %v229 = vadd.f32 %v227, %v228
    %v230 = vrot.slane %v229, 2
    %v231 = vadd.f32 %v229, %v230
    %v232 = vrot.slane %v231, 1
    %v233 = vadd.f32 %v231, %v232
    %v234 = vsel %vm206, %v226, 0.0
    %v235 = vrot.slane %v234, 4
    %v236 = vadd.f32 %v234, %v235
    %v237 = vrot.slane %v236, 2
    %v238 = vadd.f32 %v236, %v237
    %v239 = vrot.slane %v238, 1
    %v240 = vadd.f32 %v238, %v239
    %v241 = vrcp.pop %v233
    %v242 = vmul.f32 %v224, %v241
    %v243 = vrcp.pop %v240
    %v244 = vmul.f32 %v226, %v243
    %246 = vset.pattern.permute.xlu0 0
    %247 = vperm.xlu0 %246, %v242
    %v248 = vpop.permute.xlu0 %247
    %251 = vset.pattern.permute.xlu0 0
    %252 = vperm.xlu0 %251, %v244
    %v253 = vpop.permute.xlu0 %252
    %v255 = vmul.f32 %v248, %v18
    %v256 = vmul.f32 %v253, %v19
    %v257 = vsel %vm31, %v255, 0.0
    %v258 = vrot.slane %v257, 4
    %v259 = vadd.f32 %v257, %v258
    %v260 = vrot.slane %v259, 2
    %v261 = vadd.f32 %v259, %v260
    %v262 = vrot.slane %v261, 1
    %v263 = vadd.f32 %v261, %v262
    %v264 = vsel %vm31, %v256, 0.0
    %v265 = vrot.slane %v264, 4
    %v266 = vadd.f32 %v264, %v265
    %v267 = vrot.slane %v266, 2
    %v268 = vadd.f32 %v266, %v267
    %v269 = vrot.slane %v268, 1
    %v270 = vadd.f32 %v268, %v269
    %vm273 = vcmask 1041409
    %v274 = vsel %vm273, %v270, %v263
    %vm276 = vcmask 254976
    %277 = vst.msk [vmem:[#allocation2] sm:$0x3] %vm276, %v274
    // Predicated region
    $region18: #{tpu_custom_call.1} parent=1 // pred_check
      _
    $region19: #{tpu_custom_call.1} parent=1 // pred_check_branch
      %279 = sbr.rel (0) target = $region21
    $region20: #{tpu_custom_call.1} parent=1 // pred_region
      %s281 = ssub.s32 32, 32
      %282 = vsyncadd [#allocation3], %s281
      %s284 = sshll.u32 [#allocation2], 4
      %s285 = int_to_ptr.vmem [resolvable:$true] %s284
      %287 = dma.vmem_to_hbm [thread:$0]  %s285, 32, %s4, [#allocation3]
    $region21: #{tpu_custom_call.1} parent=1 // pred_fallthru
      _
    // Predicated region
    $region22: #{tpu_custom_call.1} parent=1 // pred_check
      _
    $region23: #{tpu_custom_call.1} parent=1 // pred_check_branch
      %289 = sbr.rel (0) target = $region25
    $region24: #{tpu_custom_call.1} parent=1 // pred_region
      %290 = dma.done [#allocation3], 32
    $region25: #{tpu_custom_call.1} parent=1 // pred_fallthru
      _
    %291 = vsyncpa [#allocation3], 1

</llo_original>
